<compile_context>
chip_gen: v7x
topology: tpu7x:2x2x1
jax: 0.10.0
libtpu: 0.0.40
codegen_flags: <defaults>
</compile_context>

<pallas_src>
import jax
import jax.numpy as jnp
from jax.experimental import pallas as pl
from jax.experimental.pallas import tpu as pltpu


# ----------------------------- Pallas kernel --------------------------------
def decoder_kernel(x_ref, cpm_ref, ws_ref, gamma_ref, beta_ref,
                   wpt_ref, bias_ref, out_ref):
    # x_ref     : (Bc, TL, D)      f32 activations for this (batch, row) tile
    # cpm_ref   : (Bc, 1, NL*D)    f32 pooled-cross mix (+ per-layer bias), per batch
    # ws_ref    : (NL, D, D)       bf16 per-layer self-mix weights
    # gamma/beta: (1, D)           f32 LayerNorm affine
    # wpt_ref   : (2*D, C_pad)     bf16 [wp ; wt_last], lane-padded to 128
    # bias_ref  : (1, C_pad)       f32 bp + bt[last], lane-padded
    # out_ref   : (Bc, TL, C_pad)  lane-dense output (wrapper slices to C)
    Bc, TL, D = x_ref.shape
    NL = ws_ref.shape[0]
    Cp = wpt_ref.shape[-1]
    M = Bc * TL

    # Fold the (batch-chunk, row-tile) block into the matmul M dimension; the
    # weights are batch-invariant so one (M, D) @ (D, D) per layer.
    x = x_ref[...].reshape(M, D)                     # f32 residual stream
    cpm = cpm_ref[...]                               # (Bc, 1, NL*D), f32

    # Layer loop (tiny, static trip count -> Python unroll).  bf16 operands,
    # f32 accumulation on the MXU.
    for l in range(NL):
        h = jnp.dot(x.astype(jnp.bfloat16), ws_ref[l],
                    preferred_element_type=jnp.float32)          # (M, D)
        h = h.reshape(Bc, TL, D) + cpm[:, :, l * D:(l + 1) * D]  # cross + bias
        h = jax.nn.gelu(h, approximate=True)
        x = x + h.reshape(M, D)

    # One-pass LayerNorm over D: two independent reductions (same data pass),
    # var = E[x^2] - mean^2; rsqrt goes to the EUP.
    inv_d = 1.0 / D
    mean = jnp.sum(x, axis=-1, keepdims=True) * inv_d
    ex2 = jnp.sum(x * x, axis=-1, keepdims=True) * inv_d
    var = ex2 - mean * mean
    xn = (x - mean) * jax.lax.rsqrt(var + 1e-5)
    xn = xn * gamma_ref[...] + beta_ref[...]

    # Fused epilogue: the reference Decoder overwrites `trend` every layer, so
    # only the LAST layer's trend head survives.  Concatenate [xn, x] along the
    # feature axis and hit the packed [wp ; wt_last] weight with ONE matmul;
    # bias (bp + bt[last]) folded in.  Output lanes padded to 128 -> unmasked
    # lane-dense store.
    cat = jnp.concatenate(
        [xn.astype(jnp.bfloat16), x.astype(jnp.bfloat16)], axis=-1)  # (M, 2D)
    out = (jnp.dot(cat, wpt_ref[...], preferred_element_type=jnp.float32)
           + bias_ref[...])                                          # (M, C_pad)
    out_ref[...] = out.reshape(Bc, TL, Cp).astype(out_ref.dtype)


# ------------------------------- wrapper -------------------------------------
def _pick_l_tile(L, Bc, target_rows=256):
    """Largest multiple-of-8 divisor of L keeping Bc*TL near target_rows."""
    if L % 8 != 0:
        return L                       # (8,128) rule: block dim must equal L
    candidates = [tl for tl in range(8, L + 1, 8) if L % tl == 0]
    if not candidates:
        return L
    fitting = [tl for tl in candidates if Bc * tl <= target_rows]
    return max(fitting) if fitting else min(candidates)


def decoder_forward(x, cross, edge_index, params, *,
                    num_batch_chunks=1, l_tile=None, weight_buffer_count=None):
    # num_batch_chunks : 1 on single-TC v5e/v6e; >=2 to shard across v7x's TCs.
    # l_tile           : rows of L per grid step (None -> heuristic, ~256 rows
    #                    of B*L per step so the MXU M dim stays filled).
    # weight_buffer_count : 1 -> single-buffer the grid-constant weights
    #                    (pl.Buffered(1), v7x VMEM trim); None -> default.
    del edge_index  # unused (see TODO at top)
    B, L, D = x.shape
    NL, _, C = params["wt"].shape
    NLD = NL * D
    C_pad = pl.cdiv(C, 128) * 128            # lane-dense output store

    if num_batch_chunks < 1 or B % num_batch_chunks != 0:
        raise ValueError(
            f"num_batch_chunks={num_batch_chunks} must divide B={B}")
    Bc = B // num_batch_chunks

    if l_tile is None:
        l_tile = _pick_l_tile(L, Bc)
    if L % l_tile != 0 or (l_tile != L and l_tile % 8 != 0):
        raise ValueError(f"l_tile={l_tile} incompatible with L={L}")
    TL = l_tile

    # ---- one-time XLA prep ---------------------------------------------------
    # Pooled cross -> cp_mix (all layers' cross contributions + biases) in f32.
    # Hoisting this GEMM removes the (D, NL*D) weight from VMEM/DMA entirely
    # and deletes an M=Bc (underfilled) MXU push from the kernel.
    cp = jnp.mean(cross.astype(jnp.float32), axis=1)                  # (B, D)
    wc_cat = jnp.transpose(params["wc"], (1, 0, 2)).reshape(D, NLD)
    bs_cat = params["bs"].reshape(1, NLD)
    cp_mix = (cp @ wc_cat + bs_cat).reshape(B, 1, NLD).astype(jnp.float32)

    # Weights packed as bf16 (halves HBM->VMEM DMA and resident VMEM).
    ws_bf16 = params["ws"].astype(jnp.bfloat16)                       # (NL,D,D)
    wp_pad = jnp.zeros((D, C_pad), jnp.float32).at[:, :C].set(params["wp"])
    wt_pad = jnp.zeros((D, C_pad), jnp.float32).at[:, :C].set(params["wt"][-1])
    wpt = jnp.concatenate([wp_pad, wt_pad], axis=0).astype(jnp.bfloat16)
    bias_pad = jnp.zeros((1, C_pad), jnp.float32).at[:, :C].set(
        params["bp"] + params["bt"][-1])

    pipeline_mode = (None if weight_buffer_count is None
                     else pl.Buffered(weight_buffer_count))

    def const_spec(shape):
        nd = len(shape)

        def zero_map(i, j):
            return (0,) * nd

        if pipeline_mode is None:
            return pl.BlockSpec(shape, zero_map)
        return pl.BlockSpec(shape, zero_map, pipeline_mode=pipeline_mode)

    grid = (num_batch_chunks, L // TL)

    grid_spec = pltpu.PrefetchScalarGridSpec(
        num_scalar_prefetch=0,
        grid=grid,
        in_specs=[
            pl.BlockSpec((Bc, TL, D), lambda i, j: (i, j, 0)),     # x row tile
            pl.BlockSpec((Bc, 1, NLD), lambda i, j: (i, 0, 0)),    # cp_mix
            const_spec((NL, D, D)),                                # ws (bf16)
            const_spec((1, D)),                                    # gamma
            const_spec((1, D)),                                    # beta
            const_spec((2 * D, C_pad)),                            # [wp; wt]
            const_spec((1, C_pad)),                                # bp + bt[-1]
        ],
        out_specs=pl.BlockSpec((Bc, TL, C_pad), lambda i, j: (i, j, 0)),
    )

    # Explicit VMEM budget: double-buffered activation tiles + weights + slack.
    act_tile_bytes = (Bc * TL * D + Bc * NLD + Bc * TL * C_pad) * 4
    n_wbuf = 1 if weight_buffer_count == 1 else 2
    weight_bytes = (NL * D * D * 2 + 2 * D * C_pad * 2 + (2 * D + C_pad) * 4)
    vmem_limit = int(min(max(2 * 2 * act_tile_bytes + n_wbuf * weight_bytes
                             + (4 << 20), 16 << 20), 64 << 20))

    out_padded = pl.pallas_call(
        decoder_kernel,
        out_shape=jax.ShapeDtypeStruct((B, L, C_pad), x.dtype),
        grid_spec=grid_spec,
        compiler_params=pltpu.CompilerParams(
            dimension_semantics=("parallel", "parallel"),
            vmem_limit_bytes=vmem_limit),
    )(x, cp_mix, ws_bf16, params["gamma"], params["beta"], wpt, bias_pad)

    return out_padded[:, :, :C]


# -------------------------- pure-JAX reference --------------------------------
def decoder_reference(x, cross, edge_index, params):
    del edge_index
    x = x.astype(jnp.float32)
    cross_pooled = jnp.mean(cross.astype(jnp.float32), axis=1, keepdims=True)
    NL = params["ws"].shape[0]
    trend = None
    for l in range(NL):
        h = (jnp.einsum("bld,de->ble", x, params["ws"][l])
             + jnp.einsum("bsd,de->bse", cross_pooled, params["wc"][l])
             + params["bs"][l])
        h = jax.nn.gelu(h, approximate=True)
        x = x + h
        trend = jnp.einsum("bld,dc->blc", x, params["wt"][l]) + params["bt"][l]
    mean = jnp.mean(x, axis=-1, keepdims=True)
    var = jnp.mean((x - mean) ** 2, axis=-1, keepdims=True)
    xn = (x - mean) * jax.lax.rsqrt(var + 1e-5)
    xn = xn * params["gamma"] + params["beta"]
    proj = jnp.einsum("bld,dc->blc", xn, params["wp"]) + params["bp"]
    return proj + trend


# --------------------------------- main ---------------------------------------
def make_params(key, num_layers, d_model, c_out):
    ks = jax.random.split(key, 7)
    s = 1.0 / jnp.sqrt(d_model)
    return {
        "ws": jax.random.normal(ks[0], (num_layers, d_model, d_model),
                                jnp.float32) * s,
        "wc": jax.random.normal(ks[1], (num_layers, d_model, d_model),
                                jnp.float32) * s,
        "bs": jax.random.normal(ks[2], (num_layers, 1, d_model),
                                jnp.float32) * 0.02,
        "wt": jax.random.normal(ks[3], (num_layers, d_model, c_out),
                                jnp.float32) * s,
        "bt": jax.random.normal(ks[4], (num_layers, 1, c_out),
                                jnp.float32) * 0.02,
        "gamma": jnp.ones((1, d_model), jnp.float32),
        "beta": jnp.zeros((1, d_model), jnp.float32),
        "wp": jax.random.normal(ks[5], (d_model, c_out), jnp.float32) * s,
        "bp": jax.random.normal(ks[6], (1, c_out), jnp.float32) * 0.02,
    }


if __name__ == "__main__":
    B, L, S, D, C_OUT, NUM_LAYERS = 2, 8, 16, 32, 4, 2

    key = jax.random.PRNGKey(0)
    kx, kc, kp = jax.random.split(key, 3)
    x = jax.random.normal(kx, (B, L, D), jnp.float32)
    cross = jax.random.normal(kc, (B, S, D), jnp.float32)
    edge_index = jnp.zeros((2, 4), jnp.int32)   # forwarded but unused
    params = make_params(kp, NUM_LAYERS, D, C_OUT)

    ref = decoder_reference(x, cross, edge_index, params)

    # bf16 MXU operands (f32 accumulation) -> tolerance loosened vs. the pure
    # f32 reference; this is the expected precision change, not a bug.
    TOL = dict(atol=8e-2, rtol=8e-2)

    # Single batch chunk, fully-folded rows (best on single-TC v5e/v6e).
    out1 = jax.block_until_ready(decoder_forward(x, cross, edge_index, params))
    assert out1.shape == (B, L, C_OUT)
    assert jnp.allclose(out1, ref, **TOL), "mismatch (chunks=1)"

    # 2-way parallel batch axis (shards across both TensorCores on v7x).
    out2 = jax.block_until_ready(
        decoder_forward(x, cross, edge_index, params, num_batch_chunks=2))
    assert jnp.allclose(out2, ref, **TOL), "mismatch (chunks=2)"

    # v7x VMEM trim: single-buffer the grid-constant weight inputs via
    # pipeline_mode=pl.Buffered(1).  Feature-detected so the script stays clean
    # on JAX versions whose top-level pallas_call does not accept pipeline_mode.
    try:
        out3 = jax.block_until_ready(
            decoder_forward(x, cross, edge_index, params,
                            num_batch_chunks=2, weight_buffer_count=1))
    except Exception:
        out3 = None  # TODO(synk): drop fallback once Buffered(1) is universal.
    if out3 is not None:
        assert jnp.allclose(out3, ref, **TOL), "mismatch (single-buffered)"

    print("KERNEL_OK")
</pallas_src>

<mosaic_0001>
module attributes {stable_mosaic.version = 11 : i64} {
  func.func @decoder_kernel(%arg0: i32, %arg1: i32, %arg2: memref<2x8x32xf32, #tpu.memory_space<vmem>>, %arg3: memref<2x1x64xf32, #tpu.memory_space<vmem>>, %arg4: memref<2x32x32xbf16, #tpu.memory_space<vmem>>, %arg5: memref<1x32xf32, #tpu.memory_space<vmem>>, %arg6: memref<1x32xf32, #tpu.memory_space<vmem>>, %arg7: memref<64x128xbf16, #tpu.memory_space<vmem>>, %arg8: memref<1x128xf32, #tpu.memory_space<vmem>>, %arg9: memref<2x8x128xf32, #tpu.memory_space<vmem>>) attributes {dimension_semantics = [#tpu.dimension_semantics<parallel>, #tpu.dimension_semantics<parallel>], iteration_bounds = array<i64: 1, 1>, scalar_prefetch = 0 : i64, scratch_operands = 0 : i64, tpu.core_type = #tpu.core_type<tc>, window_params = [{transform_indices = @transform_0, window_bounds = array<i64: 2, 8, 32>}, {transform_indices = @transform_1, window_bounds = array<i64: 2, 1, 64>}, {pipeline_mode = #tpu.pipeline_mode<synchronous>, transform_indices = @transform_2, window_bounds = array<i64: 2, 32, 32>}, {pipeline_mode = #tpu.pipeline_mode<synchronous>, transform_indices = @transform_3, window_bounds = array<i64: 1, 32>}, {pipeline_mode = #tpu.pipeline_mode<synchronous>, transform_indices = @transform_4, window_bounds = array<i64: 1, 32>}, {pipeline_mode = #tpu.pipeline_mode<synchronous>, transform_indices = @transform_5, window_bounds = array<i64: 64, 128>}, {pipeline_mode = #tpu.pipeline_mode<synchronous>, transform_indices = @transform_6, window_bounds = array<i64: 1, 128>}, {transform_indices = @transform_7, window_bounds = array<i64: 2, 8, 128>}]} {
    %c0 = arith.constant 0 : index
    %c0_0 = arith.constant 0 : index
    %c0_1 = arith.constant 0 : index
    %0 = vector.load %arg2[%c0, %c0_0, %c0_1] : memref<2x8x32xf32, #tpu.memory_space<vmem>>, vector<2x8x32xf32>
    %1 = vector.shape_cast %0 : vector<2x8x32xf32> to vector<16x32xf32>
    %c0_2 = arith.constant 0 : index
    %c0_3 = arith.constant 0 : index
    %c0_4 = arith.constant 0 : index
    %2 = vector.load %arg3[%c0_2, %c0_3, %c0_4] : memref<2x1x64xf32, #tpu.memory_space<vmem>>, vector<2x1x64xf32>
    %3 = arith.truncf %1 : vector<16x32xf32> to vector<16x32xbf16>
    %c0_5 = arith.constant 0 : index
    %c0_6 = arith.constant 0 : index
    %c0_7 = arith.constant 0 : index
    %4 = vector.load %arg4[%c0_5, %c0_6, %c0_7] : memref<2x32x32xbf16, #tpu.memory_space<vmem>>, vector<1x32x32xbf16>
    %5 = vector.shape_cast %4 : vector<1x32x32xbf16> to vector<32x32xbf16>
    %cst = arith.constant dense<0.000000e+00> : vector<16x32xf32>
    %6 = tpu.matmul %3, %5, %cst {dimension_numbers = #tpu.dot_dimension_numbers<[1], [0], [0], [1], [0, 0, 1, 1], [], []>} : vector<16x32xbf16>, vector<32x32xbf16>, vector<16x32xf32> -> vector<16x32xf32>
    %7 = vector.shape_cast %6 : vector<16x32xf32> to vector<2x8x32xf32>
    %8 = vector.extract_strided_slice %2 {offsets = [0, 0, 0], sizes = [2, 1, 32], strides = [1, 1, 1]} : vector<2x1x64xf32> to vector<2x1x32xf32>
    %9 = vector.broadcast %8 : vector<2x1x32xf32> to vector<2x8x32xf32>
    %10 = arith.addf %7, %9 : vector<2x8x32xf32>
    %11 = arith.mulf %10, %10 : vector<2x8x32xf32>
    %12 = arith.mulf %10, %11 : vector<2x8x32xf32>
    %cst_8 = arith.constant 4.471500e-02 : f32
    %13 = vector.broadcast %cst_8 : f32 to vector<2x8x32xf32>
    %14 = arith.mulf %13, %12 : vector<2x8x32xf32>
    %15 = arith.addf %10, %14 : vector<2x8x32xf32>
    %cst_9 = arith.constant 0.797884583 : f32
    %16 = vector.broadcast %cst_9 : f32 to vector<2x8x32xf32>
    %17 = arith.mulf %16, %15 : vector<2x8x32xf32>
    %18 = math.tanh %17 : vector<2x8x32xf32>
    %cst_10 = arith.constant 1.000000e+00 : f32
    %19 = vector.broadcast %cst_10 : f32 to vector<2x8x32xf32>
    %20 = arith.addf %19, %18 : vector<2x8x32xf32>
    %cst_11 = arith.constant 5.000000e-01 : f32
    %21 = vector.broadcast %cst_11 : f32 to vector<2x8x32xf32>
    %22 = arith.mulf %21, %20 : vector<2x8x32xf32>
    %23 = arith.mulf %10, %22 : vector<2x8x32xf32>
    %24 = vector.shape_cast %23 : vector<2x8x32xf32> to vector<16x32xf32>
    %25 = arith.addf %1, %24 : vector<16x32xf32>
    %26 = arith.truncf %25 : vector<16x32xf32> to vector<16x32xbf16>
    %c1 = arith.constant 1 : index
    %c0_12 = arith.constant 0 : index
    %c0_13 = arith.constant 0 : index
    %27 = vector.load %arg4[%c1, %c0_12, %c0_13] : memref<2x32x32xbf16, #tpu.memory_space<vmem>>, vector<1x32x32xbf16>
    %28 = vector.shape_cast %27 : vector<1x32x32xbf16> to vector<32x32xbf16>
    %cst_14 = arith.constant dense<0.000000e+00> : vector<16x32xf32>
    %29 = tpu.matmul %26, %28, %cst_14 {dimension_numbers = #tpu.dot_dimension_numbers<[1], [0], [0], [1], [0, 0, 1, 1], [], []>} : vector<16x32xbf16>, vector<32x32xbf16>, vector<16x32xf32> -> vector<16x32xf32>
    %30 = vector.shape_cast %29 : vector<16x32xf32> to vector<2x8x32xf32>
    %31 = vector.extract_strided_slice %2 {offsets = [0, 0, 32], sizes = [2, 1, 32], strides = [1, 1, 1]} : vector<2x1x64xf32> to vector<2x1x32xf32>
    %32 = vector.broadcast %31 : vector<2x1x32xf32> to vector<2x8x32xf32>
    %33 = arith.addf %30, %32 : vector<2x8x32xf32>
    %34 = arith.mulf %33, %33 : vector<2x8x32xf32>
    %35 = arith.mulf %33, %34 : vector<2x8x32xf32>
    %cst_15 = arith.constant 4.471500e-02 : f32
    %36 = vector.broadcast %cst_15 : f32 to vector<2x8x32xf32>
    %37 = arith.mulf %36, %35 : vector<2x8x32xf32>
    %38 = arith.addf %33, %37 : vector<2x8x32xf32>
    %cst_16 = arith.constant 0.797884583 : f32
    %39 = vector.broadcast %cst_16 : f32 to vector<2x8x32xf32>
    %40 = arith.mulf %39, %38 : vector<2x8x32xf32>
    %41 = math.tanh %40 : vector<2x8x32xf32>
    %cst_17 = arith.constant 1.000000e+00 : f32
    %42 = vector.broadcast %cst_17 : f32 to vector<2x8x32xf32>
    %43 = arith.addf %42, %41 : vector<2x8x32xf32>
    %cst_18 = arith.constant 5.000000e-01 : f32
    %44 = vector.broadcast %cst_18 : f32 to vector<2x8x32xf32>
    %45 = arith.mulf %44, %43 : vector<2x8x32xf32>
    %46 = arith.mulf %33, %45 : vector<2x8x32xf32>
    %47 = vector.shape_cast %46 : vector<2x8x32xf32> to vector<16x32xf32>
    %48 = arith.addf %25, %47 : vector<16x32xf32>
    %cst_19 = arith.constant dense<0.000000e+00> : vector<16xf32>
    %49 = vector.multi_reduction <add>, %48, %cst_19 [1] : vector<16x32xf32> to vector<16xf32>
    %50 = vector.shape_cast %49 : vector<16xf32> to vector<16x1xf32>
    %cst_20 = arith.constant 3.125000e-02 : f32
    %51 = vector.broadcast %cst_20 : f32 to vector<16x1xf32>
    %52 = arith.mulf %50, %51 : vector<16x1xf32>
    %53 = arith.mulf %48, %48 : vector<16x32xf32>
    %cst_21 = arith.constant dense<0.000000e+00> : vector<16xf32>
    %54 = vector.multi_reduction <add>, %53, %cst_21 [1] : vector<16x32xf32> to vector<16xf32>
    %55 = vector.shape_cast %54 : vector<16xf32> to vector<16x1xf32>
    %cst_22 = arith.constant 3.125000e-02 : f32
    %56 = vector.broadcast %cst_22 : f32 to vector<16x1xf32>
    %57 = arith.mulf %55, %56 : vector<16x1xf32>
    %58 = arith.mulf %52, %52 : vector<16x1xf32>
    %59 = arith.subf %57, %58 : vector<16x1xf32>
    %60 = vector.broadcast %52 : vector<16x1xf32> to vector<16x32xf32>
    %61 = arith.subf %48, %60 : vector<16x32xf32>
    %cst_23 = arith.constant 9.99999974E-6 : f32
    %62 = vector.broadcast %cst_23 : f32 to vector<16x1xf32>
    %63 = arith.addf %59, %62 : vector<16x1xf32>
    %64 = math.rsqrt %63 : vector<16x1xf32>
    %65 = vector.broadcast %64 : vector<16x1xf32> to vector<16x32xf32>
    %66 = arith.mulf %61, %65 : vector<16x32xf32>
    %c0_24 = arith.constant 0 : index
    %c0_25 = arith.constant 0 : index
    %67 = vector.load %arg5[%c0_24, %c0_25] : memref<1x32xf32, #tpu.memory_space<vmem>>, vector<1x32xf32>
    %68 = vector.broadcast %67 : vector<1x32xf32> to vector<16x32xf32>
    %69 = arith.mulf %66, %68 : vector<16x32xf32>
    %c0_26 = arith.constant 0 : index
    %c0_27 = arith.constant 0 : index
    %70 = vector.load %arg6[%c0_26, %c0_27] : memref<1x32xf32, #tpu.memory_space<vmem>>, vector<1x32xf32>
    %71 = vector.broadcast %70 : vector<1x32xf32> to vector<16x32xf32>
    %72 = arith.addf %69, %71 : vector<16x32xf32>
    %73 = arith.truncf %72 : vector<16x32xf32> to vector<16x32xbf16>
    %74 = arith.truncf %48 : vector<16x32xf32> to vector<16x32xbf16>
    %75 = tpu.concatenate %73, %74 in 1 : vector<16x32xbf16>, vector<16x32xbf16> -> vector<16x64xbf16>
    %c0_28 = arith.constant 0 : index
    %c0_29 = arith.constant 0 : index
    %76 = vector.load %arg7[%c0_28, %c0_29] : memref<64x128xbf16, #tpu.memory_space<vmem>>, vector<64x128xbf16>
    %cst_30 = arith.constant dense<0.000000e+00> : vector<16x128xf32>
    %77 = tpu.matmul %75, %76, %cst_30 {dimension_numbers = #tpu.dot_dimension_numbers<[1], [0], [0], [1], [0, 0, 1, 1], [], []>} : vector<16x64xbf16>, vector<64x128xbf16>, vector<16x128xf32> -> vector<16x128xf32>
    %c0_31 = arith.constant 0 : index
    %c0_32 = arith.constant 0 : index
    %78 = vector.load %arg8[%c0_31, %c0_32] : memref<1x128xf32, #tpu.memory_space<vmem>>, vector<1x128xf32>
    %79 = vector.broadcast %78 : vector<1x128xf32> to vector<16x128xf32>
    %80 = arith.addf %77, %79 : vector<16x128xf32>
    %81 = vector.shape_cast %80 : vector<16x128xf32> to vector<2x8x128xf32>
    %c0_33 = arith.constant 0 : index
    %c0_34 = arith.constant 0 : index
    %c0_35 = arith.constant 0 : index
    %82 = vector.load %arg9[%c0_33, %c0_34, %c0_35] : memref<2x8x128xf32, #tpu.memory_space<vmem>>, vector<2x8x128xf32>
    tpu.vector_store %arg9[%c0_33, %c0_34, %c0_35], %81 {strides = array<i32>} : memref<2x8x128xf32, #tpu.memory_space<vmem>>, vector<2x8x128xf32>,
    return
  }
  func.func @transform_0(%arg0: i32, %arg1: i32) -> (i32, i32, i32) {
    %c0_i32 = arith.constant 0 : i32
    %c0_i32_0 = arith.constant 0 : i32
    return %arg0, %arg1, %c0_i32 : i32, i32, i32
  }
  func.func @transform_1(%arg0: i32, %arg1: i32) -> (i32, i32, i32) {
    %c0_i32 = arith.constant 0 : i32
    %c0_i32_0 = arith.constant 0 : i32
    %c0_i32_1 = arith.constant 0 : i32
    return %arg0, %c0_i32, %c0_i32_0 : i32, i32, i32
  }
  func.func @transform_2(%arg0: i32, %arg1: i32) -> (i32, i32, i32) {
    %c0_i32 = arith.constant 0 : i32
    %c0_i32_0 = arith.constant 0 : i32
    %c0_i32_1 = arith.constant 0 : i32
    %c0_i32_2 = arith.constant 0 : i32
    return %c0_i32, %c0_i32_0, %c0_i32_1 : i32, i32, i32
  }
  func.func @transform_3(%arg0: i32, %arg1: i32) -> (i32, i32) {
    %c0_i32 = arith.constant 0 : i32
    %c0_i32_0 = arith.constant 0 : i32
    %c0_i32_1 = arith.constant 0 : i32
    return %c0_i32, %c0_i32_0 : i32, i32
  }
  func.func @transform_4(%arg0: i32, %arg1: i32) -> (i32, i32) {
    %c0_i32 = arith.constant 0 : i32
    %c0_i32_0 = arith.constant 0 : i32
    %c0_i32_1 = arith.constant 0 : i32
    return %c0_i32, %c0_i32_0 : i32, i32
  }
  func.func @transform_5(%arg0: i32, %arg1: i32) -> (i32, i32) {
    %c0_i32 = arith.constant 0 : i32
    %c0_i32_0 = arith.constant 0 : i32
    %c0_i32_1 = arith.constant 0 : i32
    return %c0_i32, %c0_i32_0 : i32, i32
  }
  func.func @transform_6(%arg0: i32, %arg1: i32) -> (i32, i32) {
    %c0_i32 = arith.constant 0 : i32
    %c0_i32_0 = arith.constant 0 : i32
    %c0_i32_1 = arith.constant 0 : i32
    return %c0_i32, %c0_i32_0 : i32, i32
  }
  func.func @transform_7(%arg0: i32, %arg1: i32) -> (i32, i32, i32) {
    %c0_i32 = arith.constant 0 : i32
    %c0_i32_0 = arith.constant 0 : i32
    return %arg0, %arg1, %c0_i32 : i32, i32, i32
  }
}

</mosaic_0001>

<llo_original>
// kernel: tpu_custom_call.1
$region0: #{tpu_custom_call.1}
  #allocation0 [shape = 'u32[]', space=smem, size = 0x4, offset = 0x4, fixed_abs, tag = 'smem constant byte address 0x4 - core index']
  #allocation1 [shape = 'u32[144,128]{1,0:T(1,128)}', space=vmem, size = 0x12000, scoped, tag = 'internal scratch']
  %s0 = inlined_call_operand.hbm [shape: f32[2,8,32], index: 0, kind: input, shape index: {}]
  %s1 = inlined_call_operand.vmem [shape: f32[2,1,64], index: 1, kind: input, shape index: {}]
  %s2 = inlined_call_operand.hbm [shape: bf16[2,32,32], index: 2, kind: input, shape index: {}]
  %s3 = inlined_call_operand.vmem [shape: f32[1,32], index: 3, kind: input, shape index: {}]
  %s4 = inlined_call_operand.vmem [shape: f32[1,32], index: 4, kind: input, shape index: {}]
  %s5 = inlined_call_operand.hbm [shape: bf16[64,128], index: 5, kind: input, shape index: {}]
  %s6 = inlined_call_operand.vmem [shape: f32[1,128], index: 6, kind: input, shape index: {}]
  %s7 = inlined_call_operand.hbm [shape: f32[2,8,128], index: 7, kind: output, shape index: {}]
  %s8 = sld [smem:[#allocation0]]
  $region50: #{tpu_custom_call.1} parent=0
    _
  %s10 = ssub.s32 1, %s8
  %s11 = scalar_select 0, %s10, %s8
  $region1: #{tpu_custom_call.1} parent=0
    #allocation2 [shape = 'u8[8192]{0}', space=vmem, size = 0x2000, scoped, tag = 'input window, operand 0, single buffered']
    #allocation3 [shape = 's32[1]{0}', space=sflag, size = 0x4, scoped, tag = 'scoped memory for tpu_custom_call.1']
    #allocation4 [shape = 's32[1]{0}', space=sflag, size = 0x4, scoped, tag = 'scoped memory for tpu_custom_call.1']
    #allocation5 [shape = 'u8[16384]{0}', space=vmem, size = 0x4000, scoped, tag = 'input window, operand 2, single buffered']
    #allocation6 [shape = 's32[1]{0}', space=sflag, size = 0x4, scoped, tag = 'scoped memory for tpu_custom_call.1']
    #allocation7 [shape = 'u8[16384]{0}', space=vmem, size = 0x4000, scoped, tag = 'input window, operand 5, single buffered']
    #allocation8 [shape = 'u8[8192]{0}', space=vmem, size = 0x2000, scoped, tag = 'output window, operand 0, single buffered']
    %12 = vsyncpa [#allocation3], 0
    %13 = vsyncpa [#allocation6], 0
    %14 = vsyncpa [#allocation4], 0
    // Predicated region
    $region2: #{tpu_custom_call.1} parent=1 // pred_check
      _
    $region3: #{tpu_custom_call.1} parent=1 // pred_check_branch
      %16 = sbr.rel (0) target = $region5
    $region4: #{tpu_custom_call.1} parent=1 // pred_region
      %s18 = ssub.s32 256, 256
      %19 = vsyncadd [#allocation3], %s18
      %s20 = sshll.u32 [#allocation2], 4
      %s21 = int_to_ptr.vmem [resolvable:$true] %s20
      %26 = dma.hbm_to_vmem [thread:$0]  %s0, 256, %s21, [#allocation3], 128, 128, 8
    $region5: #{tpu_custom_call.1} parent=1 // pred_fallthru
      _
    // Predicated region
    $region6: #{tpu_custom_call.1} parent=1 // pred_check
      _
    $region7: #{tpu_custom_call.1} parent=1 // pred_check_branch
      %28 = sbr.rel (0) target = $region9
    $region8: #{tpu_custom_call.1} parent=1 // pred_region
      _
    $region9: #{tpu_custom_call.1} parent=1 // pred_fallthru
      _
    // Predicated region
    $region10: #{tpu_custom_call.1} parent=1 // pred_check
      _
    $region11: #{tpu_custom_call.1} parent=1 // pred_check_branch
      %30 = sbr.rel (0) target = $region13
    $region12: #{tpu_custom_call.1} parent=1 // pred_region
      %s32 = ssub.s32 512, 512
      %33 = vsyncadd [#allocation6], %s32
      %s34 = sshll.u32 [#allocation5], 4
      %s35 = int_to_ptr.vmem [resolvable:$true] %s34
      %40 = dma.hbm_to_vmem [thread:$0]  %s2, 512, %s35, [#allocation6], 64, 64, 4
    $region13: #{tpu_custom_call.1} parent=1 // pred_fallthru
      _
    // Predicated region
    $region14: #{tpu_custom_call.1} parent=1 // pred_check
      _
    $region15: #{tpu_custom_call.1} parent=1 // pred_check_branch
      %42 = sbr.rel (0) target = $region17
    $region16: #{tpu_custom_call.1} parent=1 // pred_region
      _
    $region17: #{tpu_custom_call.1} parent=1 // pred_fallthru
      _
    // Predicated region
    $region18: #{tpu_custom_call.1} parent=1 // pred_check
      _
    $region19: #{tpu_custom_call.1} parent=1 // pred_check_branch
      %44 = sbr.rel (0) target = $region21
    $region20: #{tpu_custom_call.1} parent=1 // pred_region
      _
    $region21: #{tpu_custom_call.1} parent=1 // pred_fallthru
      _
    // Predicated region
    $region22: #{tpu_custom_call.1} parent=1 // pred_check
      _
    $region23: #{tpu_custom_call.1} parent=1 // pred_check_branch
      %46 = sbr.rel (0) target = $region25
    $region24: #{tpu_custom_call.1} parent=1 // pred_region
      %s48 = ssub.s32 512, 512
      %49 = vsyncadd [#allocation6], %s48
      %s50 = sshll.u32 [#allocation7], 4
      %s51 = int_to_ptr.vmem [resolvable:$true] %s50
      %56 = dma.hbm_to_vmem [thread:$0]  %s5, 512, %s51, [#allocation6], 64, 64, 4
    $region25: #{tpu_custom_call.1} parent=1 // pred_fallthru
      _
    // Predicated region
    $region26: #{tpu_custom_call.1} parent=1 // pred_check
      _
    $region27: #{tpu_custom_call.1} parent=1 // pred_check_branch
      %58 = sbr.rel (0) target = $region29
    $region28: #{tpu_custom_call.1} parent=1 // pred_region
      _
    $region29: #{tpu_custom_call.1} parent=1 // pred_fallthru
      _
    // Predicated region
    $region30: #{tpu_custom_call.1} parent=1 // pred_check
      _
    $region31: #{tpu_custom_call.1} parent=1 // pred_check_branch
      %60 = sbr.rel (0) target = $region33
    $region32: #{tpu_custom_call.1} parent=1 // pred_region
      %61 = dma.done [#allocation3], 256
    $region33: #{tpu_custom_call.1} parent=1 // pred_fallthru
      _
    // Predicated region
    $region34: #{tpu_custom_call.1} parent=1 // pred_check
      _
    $region35: #{tpu_custom_call.1} parent=1 // pred_check_branch
      %63 = sbr.rel (0) target = $region37
    $region36: #{tpu_custom_call.1} parent=1 // pred_region
      %64 = dma.done [#allocation6], 512
    $region37: #{tpu_custom_call.1} parent=1 // pred_fallthru
      _
    // Predicated region
    $region38: #{tpu_custom_call.1} parent=1 // pred_check
      _
    $region39: #{tpu_custom_call.1} parent=1 // pred_check_branch
      %66 = sbr.rel (0) target = $region41
    $region40: #{tpu_custom_call.1} parent=1 // pred_region
      %67 = dma.done [#allocation6], 512
    $region41: #{tpu_custom_call.1} parent=1 // pred_fallthru
      _
    %v69 = vld [vmem:[#allocation2] sm:$0xff]
    %v70 = vld [vmem:[#allocation2 + $0x8] sm:$0xff]
    %v71 = vld [vmem:[%s1] sm:$0x1]
    %v72 = vld [vmem:[%s1 + $0x1] sm:$0x1]
    %v73 = vpack.c.bf16 %v70, %v69
    %v74 = vld [vmem:[#allocation5] sm:$0xf]
    %v75 = vld [vmem:[#allocation5 + $0x4] sm:$0xf]
    %v76 = vld [vmem:[#allocation5 + $0x8] sm:$0xf]
    %v77 = vld [vmem:[#allocation5 + $0xc] sm:$0xf]
    %v82 = vunpack.c.l.b16 %v74
    %v83 = vunpack.c.l.b16 %v75
    %v84 = vunpack.c.l.b16 %v76
    %v85 = vunpack.c.l.b16 %v77
    %v86 = vpack.c.b16 %v83, %v82
    %v87 = vpack.c.b16 %v85, %v84
    %vm90 = vcmask 261120
    %v92 = vsel %vm90, %v73, 0
    %94 = vmatprep.subr.bf16.mxu0 0
    %95 = vmatpush1.bf16.msra.mxu0 %v86
    %96 = vmatprep.subr.bf16.mxu0 0
    %97 = vmatpush1.bf16.msra.mxu0 %v87
    %98 = vmatprep.subr.bf16.mxu0 0
    %99 = vmatpush1.bf16.msra.mxu0 0
    %100 = vmatprep.subr.bf16.mxu0 0
    %101 = vmatpush1.bf16.msra.mxu0 0
    %102 = vmatprep.subr.bf16.mxu0 0
    %103 = vmatpush1.bf16.msra.mxu0 0
    %104 = vmatprep.subr.bf16.mxu0 0
    %105 = vmatpush1.bf16.msra.mxu0 0
    %106 = vmatprep.subr.bf16.mxu0 0
    %107 = vmatpush1.bf16.msra.mxu0 0
    %108 = vmatprep.subr.bf16.mxu0 0
    %109 = vmatpush1.bf16.msra.mxu0 0
    %110 = vmatprep.subr.bf16.mxu0 0
    %111 = vmatpush1.bf16.msra.mxu0 0
    %112 = vmatprep.subr.bf16.mxu0 0
    %113 = vmatpush1.bf16.msra.mxu0 0
    %114 = vmatprep.subr.bf16.mxu0 0
    %115 = vmatpush1.bf16.msra.mxu0 0
    %116 = vmatprep.subr.bf16.mxu0 0
    %117 = vmatpush1.bf16.msra.mxu0 0
    %118 = vmatprep.subr.bf16.mxu0 0
    %119 = vmatpush1.bf16.msra.mxu0 0
    %120 = vmatprep.subr.bf16.mxu0 0
    %121 = vmatpush1.bf16.msra.mxu0 0
    %122 = vmatprep.subr.bf16.mxu0 0
    %123 = vmatpush1.bf16.msra.mxu0 0
    %124 = vmatprep.subr.bf16.mxu0 0
    %125 = vmatpush1.bf16.msra.mxu0 0
    %126 = vmatprep.mubr.bf16.mxu0 0
    %127 = vmatmul.mubr.bf16.gmra.mrb[0].mxu0 %v92
    %v128 = vpop.f32.mrb[0].mxu0
    %v129 = vadd.f32 0.0, %v128
    %v130 = vpop.f32.mrb[0].mxu0
    %v131 = vpop.f32.mrb[0].mxu0
    %v132 = vadd.f32 0.0, %v131
    %v133 = vpop.f32.mrb[0].mxu0
    %134 = vdwg.mxu0
    %v137 = vlaneseq
    %v138 = vshrl.u32 %v137, 7
    %v139 = vsub.s32 0, %v138
    %v140 = vrot.slane %v71, %v139
    %v141 = vlaneseq
    %v142 = vshrl.u32 %v141, 7
    %v143 = vsub.s32 0, %v142
    %v144 = vrot.slane %v72, %v143
    %v147 = vadd.f32 %v129, %v140
    %v148 = vadd.f32 %v132, %v144
    %v149 = vmul.f32 %v147, %v147
    %v150 = vmul.f32 %v148, %v148
    %v151 = vmul.f32 %v147, %v149
    %v152 = vmul.f32 %v148, %v150
    %v153 = vmul.f32 %v151, 0.044715
    %v154 = vmul.f32 %v152, 0.044715
    %v155 = vadd.f32 %v147, %v153
    %v156 = vadd.f32 %v148, %v154
    %v157 = vmul.f32 %v155, 0.7978846
    %v158 = vmul.f32 %v156, 0.7978846
    %v159 = vtanh.pop %v157
    %v160 = vtanh.pop %v158
    %v161 = vadd.f32 %v159, 1.0
    %v162 = vadd.f32 %v160, 1.0
    %v163 = vmul.f32 %v161, 0.5
    %v164 = vmul.f32 %v162, 0.5
    %v165 = vmul.f32 %v147, %v163
    %v166 = vmul.f32 %v148, %v164
    %v167 = vadd.f32 %v69, %v165
    %v168 = vadd.f32 %v70, %v166
    %v169 = vpack.c.bf16 %v168, %v167
    %s170 = scalar_lea.vmem [#allocation5], 16
    %v171 = vld [vmem:[%s170] sm:$0xf]
    %v172 = vld [vmem:[%s170 + $0x4] sm:$0xf]
    %v173 = vld [vmem:[%s170 + $0x8] sm:$0xf]
    %v174 = vld [vmem:[%s170 + $0xc] sm:$0xf]
    %v179 = vunpack.c.l.b16 %v171
    %v180 = vunpack.c.l.b16 %v172
    %v181 = vunpack.c.l.b16 %v173
    %v182 = vunpack.c.l.b16 %v174
    %v183 = vpack.c.b16 %v180, %v179
    %v184 = vpack.c.b16 %v182, %v181
    %v188 = vsel %vm90, %v169, 0
    %190 = vmatprep.subr.bf16.mxu0 0
    %191 = vmatpush1.bf16.msra.mxu0 %v183
    %192 = vmatprep.subr.bf16.mxu0 0
    %193 = vmatpush1.bf16.msra.mxu0 %v184
    %194 = vmatprep.subr.bf16.mxu0 0
    %195 = vmatpush1.bf16.msra.mxu0 0
    %196 = vmatprep.subr.bf16.mxu0 0
    %197 = vmatpush1.bf16.msra.mxu0 0
    %198 = vmatprep.subr.bf16.mxu0 0
    %199 = vmatpush1.bf16.msra.mxu0 0
    %200 = vmatprep.subr.bf16.mxu0 0
    %201 = vmatpush1.bf16.msra.mxu0 0
    %202 = vmatprep.subr.bf16.mxu0 0
    %203 = vmatpush1.bf16.msra.mxu0 0
    %204 = vmatprep.subr.bf16.mxu0 0
    %205 = vmatpush1.bf16.msra.mxu0 0
    %206 = vmatprep.subr.bf16.mxu0 0
    %207 = vmatpush1.bf16.msra.mxu0 0
    %208 = vmatprep.subr.bf16.mxu0 0
    %209 = vmatpush1.bf16.msra.mxu0 0
    %210 = vmatprep.subr.bf16.mxu0 0
    %211 = vmatpush1.bf16.msra.mxu0 0
    %212 = vmatprep.subr.bf16.mxu0 0
    %213 = vmatpush1.bf16.msra.mxu0 0
    %214 = vmatprep.subr.bf16.mxu0 0
    %215 = vmatpush1.bf16.msra.mxu0 0
    %216 = vmatprep.subr.bf16.mxu0 0
    %217 = vmatpush1.bf16.msra.mxu0 0
    %218 = vmatprep.subr.bf16.mxu0 0
    %219 = vmatpush1.bf16.msra.mxu0 0
    %220 = vmatprep.subr.bf16.mxu0 0
    %221 = vmatpush1.bf16.msra.mxu0 0
    %222 = vmatprep.mubr.bf16.mxu0 0
    %223 = vmatmul.mubr.bf16.gmra.mrb[0].mxu0 %v188
    %v224 = vpop.f32.mrb[0].mxu0
    %v225 = vadd.f32 0.0, %v224
    %v226 = vpop.f32.mrb[0].mxu0
    %v227 = vpop.f32.mrb[0].mxu0
    %v228 = vadd.f32 0.0, %v227
    %v229 = vpop.f32.mrb[0].mxu0
    %230 = vdwg.mxu0
    %231 = vrot.lane.b32.xlu0 %v140, 96
    %v232 = vpop.permute.xlu0 %231
    %233 = vrot.lane.b32.xlu0 %v144, 96
    %v234 = vpop.permute.xlu0 %233
    %v237 = vadd.f32 %v225, %v232
    %v238 = vadd.f32 %v228, %v234
    %v239 = vmul.f32 %v237, %v237
    %v240 = vmul.f32 %v238, %v238
    %v241 = vmul.f32 %v237, %v239
    %v242 = vmul.f32 %v238, %v240
    %v243 = vmul.f32 %v241, 0.044715
    %v244 = vmul.f32 %v242, 0.044715
    %v245 = vadd.f32 %v237, %v243
    %v246 = vadd.f32 %v238, %v244
    %v247 = vmul.f32 %v245, 0.7978846
    %v248 = vmul.f32 %v246, 0.7978846
    %v249 = vtanh.pop %v247
    %v250 = vtanh.pop %v248
    %v251 = vadd.f32 %v249, 1.0
    %v252 = vadd.f32 %v250, 1.0
    %v253 = vmul.f32 %v251, 0.5
    %v254 = vmul.f32 %v252, 0.5
    %v255 = vmul.f32 %v237, %v253
    %v256 = vmul.f32 %v238, %v254
    %v257 = vadd.f32 %v167, %v255
    %v258 = vadd.f32 %v168, %v256
    %v259 = vsel %vm90, %v257, 0.0
    %260 = vadd.xlane.f32.xlu0 %v259
    %v261 = vpop.xlane.xlu0 %260
    %v262 = vsel %vm90, %v258, 0.0
    %263 = vadd.xlane.f32.xlu0 %v262
    %v264 = vpop.xlane.xlu0 %263
    %v265 = vmul.f32 %v261, 0.03125
    %v266 = vmul.f32 %v264, 0.03125
    %v267 = vmul.f32 %v257, %v257
    %v268 = vmul.f32 %v258, %v258
    %v269 = vsel %vm90, %v267, 0.0
    %270 = vadd.xlane.f32.xlu0 %v269
    %v271 = vpop.xlane.xlu0 %270
    %v272 = vsel %vm90, %v268, 0.0
    %273 = vadd.xlane.f32.xlu0 %v272
    %v274 = vpop.xlane.xlu0 %273
    %v275 = vmul.f32 %v271, 0.03125
    %v276 = vmul.f32 %v274, 0.03125
    %v277 = vmul.f32 %v265, %v265
    %v278 = vmul.f32 %v266, %v266
    %v279 = vsub.f32 %v275, %v277
    %v280 = vsub.f32 %v276, %v278
    %v281 = vsub.f32 %v257, %v265
    %v282 = vsub.f32 %v258, %v266
    %v283 = vadd.f32 %v279, 1e-05
    %v284 = vadd.f32 %v280, 1e-05
    %v285 = vrsqrt.pop %v283
    %v286 = vrsqrt.pop %v284
    %v287 = vmul.f32 %v281, %v285
    %v288 = vmul.f32 %v282, %v286
    %v289 = vld [vmem:[%s3] sm:$0x1]
    %v291 = vlaneseq
    %v292 = vshrl.u32 %v291, 7
    %v293 = vsub.s32 0, %v292
    %v294 = vrot.slane %v289, %v293
    %v296 = vmul.f32 %v287, %v294
    %v297 = vmul.f32 %v288, %v294
    %v298 = vld [vmem:[%s4] sm:$0x1]
    %v300 = vlaneseq
    %v301 = vshrl.u32 %v300, 7
    %v302 = vsub.s32 0, %v301
    %v303 = vrot.slane %v298, %v302
    %v305 = vadd.f32 %v296, %v303
    %v306 = vadd.f32 %v297, %v303
    %v307 = vpack.c.bf16 %v306, %v305
    %v308 = vpack.c.bf16 %v258, %v257
    %310 = vrot.lane.b32.xlu0 %v308, 32
    %v311 = vpop.permute.xlu0 %310
    %v314 = vsel %vm90, %v307, %v311
    %v315 = vld [vmem:[#allocation7] sm:$0xf]
    %v316 = vld [vmem:[#allocation7 + $0x4] sm:$0xf]
    %v317 = vld [vmem:[#allocation7 + $0x8] sm:$0xf]
    %v318 = vld [vmem:[#allocation7 + $0xc] sm:$0xf]
    %v319 = vld [vmem:[#allocation7 + $0x10] sm:$0xf]
    %v320 = vld [vmem:[#allocation7 + $0x14] sm:$0xf]
    %v321 = vld [vmem:[#allocation7 + $0x18] sm:$0xf]
    %v322 = vld [vmem:[#allocation7 + $0x1c] sm:$0xf]
    %v323 = vld [vmem:[%s6] sm:$0x1]
    %v325 = vlaneseq
    %v326 = vshrl.u32 %v325, 7
    %v327 = vsub.s32 0, %v326
    %v328 = vrot.slane %v323, %v327
    %v338 = vunpack.c.l.b16 %v315
    %v339 = vunpack.c.l.b16 %v316
    %v340 = vunpack.c.l.b16 %v317
    %v341 = vunpack.c.l.b16 %v318
    %v342 = vunpack.c.l.b16 %v319
    %v343 = vunpack.c.l.b16 %v320
    %v344 = vunpack.c.l.b16 %v321
    %v345 = vunpack.c.l.b16 %v322
    %v346 = vpack.c.b16 %v339, %v338
    %v347 = vpack.c.b16 %v341, %v340
    %v348 = vpack.c.b16 %v343, %v342
    %v349 = vpack.c.b16 %v345, %v344
    %vm354 = vcmask 523264
    %v355 = vsel %vm354, %v314, 0
    %357 = vmatprep.subr.bf16.mxu0 0
    %358 = vmatpush1.bf16.msra.mxu0 %v346
    %359 = vmatprep.subr.bf16.mxu0 0
    %360 = vmatpush1.bf16.msra.mxu0 %v347
    %361 = vmatprep.subr.bf16.mxu0 0
    %362 = vmatpush1.bf16.msra.mxu0 %v348
    %363 = vmatprep.subr.bf16.mxu0 0
    %364 = vmatpush1.bf16.msra.mxu0 %v349
    %365 = vmatprep.subr.bf16.mxu0 0
    %366 = vmatpush1.bf16.msra.mxu0 0
    %367 = vmatprep.subr.bf16.mxu0 0
    %368 = vmatpush1.bf16.msra.mxu0 0
    %369 = vmatprep.subr.bf16.mxu0 0
    %370 = vmatpush1.bf16.msra.mxu0 0
    %371 = vmatprep.subr.bf16.mxu0 0
    %372 = vmatpush1.bf16.msra.mxu0 0
    %373 = vmatprep.subr.bf16.mxu0 0
    %374 = vmatpush1.bf16.msra.mxu0 0
    %375 = vmatprep.subr.bf16.mxu0 0
    %376 = vmatpush1.bf16.msra.mxu0 0
    %377 = vmatprep.subr.bf16.mxu0 0
    %378 = vmatpush1.bf16.msra.mxu0 0
    %379 = vmatprep.subr.bf16.mxu0 0
    %380 = vmatpush1.bf16.msra.mxu0 0
    %381 = vmatprep.subr.bf16.mxu0 0
    %382 = vmatpush1.bf16.msra.mxu0 0
    %383 = vmatprep.subr.bf16.mxu0 0
    %384 = vmatpush1.bf16.msra.mxu0 0
    %385 = vmatprep.subr.bf16.mxu0 0
    %386 = vmatpush1.bf16.msra.mxu0 0
    %387 = vmatprep.subr.bf16.mxu0 0
    %388 = vmatpush1.bf16.msra.mxu0 0
    %389 = vmatprep.mubr.bf16.mxu0 0
    %390 = vmatmul.mubr.bf16.gmra.mrb[0].mxu0 %v355
    %v391 = vpop.f32.mrb[0].mxu0
    %v392 = vadd.f32 %v328, %v391
    %v393 = vpop.f32.mrb[0].mxu0
    %v394 = vpop.f32.mrb[0].mxu0
    %v395 = vadd.f32 %v328, %v394
    %v396 = vpop.f32.mrb[0].mxu0
    %397 = vdwg.mxu0
    %398 = vst [vmem:[#allocation8] sm:$0xff] %v392
    %399 = vst [vmem:[#allocation8 + $0x8] sm:$0xff] %v395
    // Predicated region
    $region42: #{tpu_custom_call.1} parent=1 // pred_check
      _
    $region43: #{tpu_custom_call.1} parent=1 // pred_check_branch
      %401 = sbr.rel (0) target = $region45
    $region44: #{tpu_custom_call.1} parent=1 // pred_region
      %s403 = ssub.s32 256, 256
      %404 = vsyncadd [#allocation4], %s403
      %s405 = sshll.u32 [#allocation8], 4
      %s406 = int_to_ptr.vmem [resolvable:$true] %s405
      %411 = dma.vmem_to_hbm [thread:$0]  %s406, 256, %s7, [#allocation4], 128, 128, 8
    $region45: #{tpu_custom_call.1} parent=1 // pred_fallthru
      _
    // Predicated region
    $region46: #{tpu_custom_call.1} parent=1 // pred_check
      _
    $region47: #{tpu_custom_call.1} parent=1 // pred_check_branch
      %413 = sbr.rel (0) target = $region49
    $region48: #{tpu_custom_call.1} parent=1 // pred_region
      %414 = dma.done [#allocation4], 256
    $region49: #{tpu_custom_call.1} parent=1 // pred_fallthru
      _
    %415 = vsyncpa [#allocation3], 1
    %416 = vsyncpa [#allocation6], 1
    %417 = vsyncpa [#allocation4], 1

</llo_original>
